<compile_context>
chip_gen: v7x
topology: tpu7x:2x2x1
jax: 0.10.0
libtpu: 0.0.40
codegen_flags: <defaults>
</compile_context>

<pallas_src>
import math
from functools import partial

import jax
import jax.numpy as jnp
from jax.experimental import pallas as pl
from jax.experimental.pallas import tpu as pltpu


_GELU_C = math.sqrt(2.0 / math.pi)


def _gelu_tanh(x):
    # torch.nn.functional.gelu(..., approximate='tanh')
    return 0.5 * x * (1.0 + jnp.tanh(_GELU_C * (x + 0.044715 * x * x * x)))


# --------------------------------- kernel ------------------------------------
def mlp_kernel(x_ref, w1_ref, b1_ref, w2_ref, b2_ref, out_ref, acc_ref):
    # Grid: (i over row tiles ["parallel"], k over intermediate tiles ["arbitrary"])
    # x_ref:  (TM, D)        w1_ref: (D, TI) bf16   b1_ref: (1, TI) f32
    # w2_ref: (TI, D) bf16   b2_ref: (1, D)  f32    out_ref: (TM, D)
    # acc_ref: (TM, D) f32 scratch — fc2 partial sums across the I axis.
    k = pl.program_id(1)

    @pl.when(k == 0)
    def _():
        acc_ref[...] = jnp.zeros_like(acc_ref)

    x = x_ref[...].astype(jnp.bfloat16)                      # bf16 MXU inputs
    h = jnp.dot(x, w1_ref[...], preferred_element_type=jnp.float32) + b1_ref[...]
    h = _gelu_tanh(h)
    acc_ref[...] += jnp.dot(h.astype(jnp.bfloat16), w2_ref[...],
                            preferred_element_type=jnp.float32)

    @pl.when(k == pl.num_programs(1) - 1)
    def _():
        out_ref[...] = (acc_ref[...] + b2_ref[...]).astype(out_ref.dtype)


# --------------------------------- wrapper ------------------------------------
def _round_up(x, m):
    return ((x + m - 1) // m) * m


def _pick_tm(m, block_rows):
    """Row-tile: 8-aligned, capped, >= 2 grid steps so both v7x TCs get work."""
    if m <= 8:
        return m                      # single full block (block dim == array dim)
    tm = min(block_rows, _round_up(pl.cdiv(m, 2), 8))
    return min(tm, _round_up(m, 8))


def _pick_ti(i_dim, block_inter):
    """Intermediate-dim tile: must divide I exactly and be a multiple of 128."""
    if i_dim <= block_inter or i_dim % 128 != 0:
        return i_dim
    best = None
    t = 128
    while t <= block_inter:
        if i_dim % t == 0:
            best = t
        t += 128
    return best if best is not None else i_dim


@partial(jax.jit, static_argnames=("block_rows", "block_inter"))
def siglip_mlp(hidden_states, w1, b1, w2, b2, *, block_rows=512, block_inter=2048):
    """SigliMLP.forward: fc1 -> tanh-GELU -> fc2, fused into one Pallas kernel.

    hidden_states: (B, N, D);  w1: (D, I), b1: (1, I), w2: (I, D), b2: (1, D)
    """
    B, N, D = hidden_states.shape
    I = w1.shape[1]
    M = B * N

    x2d = hidden_states.reshape(M, D)
    # Weights in bf16 (MXU-native on all gens), biases kept f32 (added post-acc).
    w1b = w1.astype(jnp.bfloat16)
    w2b = w2.astype(jnp.bfloat16)
    b1f = b1.astype(jnp.float32)
    b2f = b2.astype(jnp.float32)

    TM = _pick_tm(M, block_rows)
    TI = _pick_ti(I, block_inter)
    grid_m = pl.cdiv(M, TM)
    grid_k = I // TI                      # TI always divides I exactly

    single_w = (grid_k == 1)              # weights grid-invariant -> 1 buffer

    def spec(shape, index_map, single_buffer=False):
        if single_buffer:
            return pl.BlockSpec(shape, index_map, pipeline_mode=pl.Buffered(1))
        return pl.BlockSpec(shape, index_map)

    # VMEM budget for this tile plan (bytes), with headroom.
    wbuf = 1 if single_w else 2
    xb = x2d.dtype.itemsize
    ob = hidden_states.dtype.itemsize
    vmem = (2 * TM * D * xb               # x blocks (double-buffered)
            + 2 * TM * D * ob             # out blocks
            + wbuf * D * TI * 2           # w1 (bf16)
            + wbuf * TI * D * 2           # w2 (bf16)
            + wbuf * 8 * TI * 4           # b1 (f32, sublane-padded)
            + 8 * D * 4                   # b2 (f32, sublane-padded)
            + TM * D * 4                  # fc2 accumulator scratch
            + TM * TI * 6                 # h (f32) + bf16 copy of h
            + TM * D * 2)                 # bf16 copy of x
    vmem_limit = min(max(int(vmem * 1.5) + (2 << 20), 8 << 20), 64 << 20)

    cost = pl.CostEstimate(
        flops=4 * M * D * I,                                   # two MxDxI matmuls
        transcendentals=M * I,                                 # tanh in the GELU
        bytes_accessed=M * D * (xb + ob) + 2 * D * I * 2 + (I + D) * 4,
    )

    out = pl.pallas_call(
        mlp_kernel,
        out_shape=jax.ShapeDtypeStruct((M, D), hidden_states.dtype),
        grid=(grid_m, grid_k),
        in_specs=[
            spec((TM, D), lambda i, k: (i, 0)),                # activation rows
            spec((D, TI), lambda i, k: (0, k), single_w),      # w1
            spec((1, TI), lambda i, k: (0, k), single_w),      # b1
            spec((TI, D), lambda i, k: (k, 0), single_w),      # w2
            spec((1, D), lambda i, k: (0, 0), True),           # b2 (always const)
        ],
        out_specs=pl.BlockSpec((TM, D), lambda i, k: (i, 0)),
        scratch_shapes=[pltpu.VMEM((TM, D), jnp.float32)],
        compiler_params=pltpu.CompilerParams(
            dimension_semantics=("parallel", "arbitrary"),
            vmem_limit_bytes=vmem_limit,
        ),
        cost_estimate=cost,
    )(x2d, w1b, b1f, w2b, b2f)

    return out.reshape(B, N, D)


# ---------------------------------- main --------------------------------------
if __name__ == "__main__":
    key = jax.random.PRNGKey(0)
    k_x, k_w1, k_b1, k_w2, k_b2 = jax.random.split(key, 5)

    # Small, lane-dense SigLIP-like config.  Real SigLIP is D=768, I=3072,
    # M in the thousands — tune block_rows/block_inter at those sizes.
    B, N, D, I = 2, 8, 128, 256

    x = jax.random.normal(k_x, (B, N, D), dtype=jnp.float32)
    w1 = 0.05 * jax.random.normal(k_w1, (D, I), dtype=jnp.float32)
    b1 = 0.05 * jax.random.normal(k_b1, (1, I), dtype=jnp.float32)
    w2 = 0.05 * jax.random.normal(k_w2, (I, D), dtype=jnp.float32)
    b2 = 0.05 * jax.random.normal(k_b2, (1, D), dtype=jnp.float32)

    # block_inter=128 forces the I-tiled accumulator path (grid_k=2) so the
    # v7x/v5e tiling+accumulator code path is exercised even at this toy size;
    # block_rows default gives 2 row tiles (grid_m=2) as well.
    out = siglip_mlp(x, w1, b1, w2, b2, block_rows=512, block_inter=128)
    out = jax.block_until_ready(out)

    # High-precision pure-JAX reference (fc1 -> tanh-GELU -> fc2).
    hp = jax.lax.Precision.HIGHEST
    ref = jnp.dot(x.reshape(-1, D), w1, precision=hp) + b1
    ref = _gelu_tanh(ref)
    ref = (jnp.dot(ref, w2, precision=hp) + b2).reshape(B, N, D)

    assert out.shape == (B, N, D), out.shape
    assert out.dtype == jnp.float32
    assert bool(jnp.all(jnp.isfinite(out)))
    max_err = float(jnp.max(jnp.abs(out - ref)))
    scale = float(jnp.max(jnp.abs(ref)))
    # bf16 MXU inputs with f32 accumulation vs f32-HIGHEST reference.
    assert max_err <= 3e-2 * scale + 5e-3, f"max abs err {max_err} (scale {scale})"
    print("KERNEL_OK")
</pallas_src>

<mosaic_0001>
module attributes {stable_mosaic.version = 11 : i64} {
  func.func @mlp_kernel(%arg0: i32, %arg1: i32, %arg2: memref<8x128xf32, #tpu.memory_space<vmem>>, %arg3: memref<128x128xbf16, #tpu.memory_space<vmem>>, %arg4: memref<1x128xf32, #tpu.memory_space<vmem>>, %arg5: memref<128x128xbf16, #tpu.memory_space<vmem>>, %arg6: memref<1x128xf32, #tpu.memory_space<vmem>>, %arg7: memref<8x128xf32, #tpu.memory_space<vmem>>, %arg8: memref<8x128xf32, #tpu.memory_space<vmem>>) attributes {dimension_semantics = [#tpu.dimension_semantics<parallel>, #tpu.dimension_semantics<arbitrary>], iteration_bounds = array<i64: 2, 2>, scalar_prefetch = 0 : i64, scratch_operands = 1 : i64, tpu.core_type = #tpu.core_type<tc>, window_params = [{transform_indices = @transform_0, window_bounds = array<i64: 8, 128>}, {transform_indices = @transform_1, window_bounds = array<i64: 128, 128>}, {transform_indices = @transform_2, window_bounds = array<i64: 1, 128>}, {transform_indices = @transform_3, window_bounds = array<i64: 128, 128>}, {pipeline_mode = #tpu.pipeline_mode<synchronous>, transform_indices = @transform_4, window_bounds = array<i64: 1, 128>}, {transform_indices = @transform_5, window_bounds = array<i64: 8, 128>}]} {
    %c0_i32 = arith.constant 0 : i32
    %0 = arith.cmpi eq, %arg1, %c0_i32 : i32
    %1 = arith.extui %0 : i1 to i32
    %c0_i32_0 = arith.constant 0 : i32
    %2 = arith.cmpi ne, %1, %c0_i32_0 : i32
    scf.if %2 {
      %cst_18 = arith.constant 0.000000e+00 : f32
      %32 = vector.broadcast %cst_18 : f32 to vector<8x128xf32>
      %c0_19 = arith.constant 0 : index
      %c0_20 = arith.constant 0 : index
      %33 = vector.load %arg8[%c0_19, %c0_20] : memref<8x128xf32, #tpu.memory_space<vmem>>, vector<8x128xf32>
      tpu.vector_store %arg8[%c0_19, %c0_20], %32 {strides = array<i32>} : memref<8x128xf32, #tpu.memory_space<vmem>>, vector<8x128xf32>,
    } else {
    }
    %c0 = arith.constant 0 : index
    %c0_1 = arith.constant 0 : index
    %3 = vector.load %arg2[%c0, %c0_1] : memref<8x128xf32, #tpu.memory_space<vmem>>, vector<8x128xf32>
    %4 = arith.truncf %3 : vector<8x128xf32> to vector<8x128xbf16>
    %c0_2 = arith.constant 0 : index
    %c0_3 = arith.constant 0 : index
    %5 = vector.load %arg3[%c0_2, %c0_3] : memref<128x128xbf16, #tpu.memory_space<vmem>>, vector<128x128xbf16>
    %cst = arith.constant dense<0.000000e+00> : vector<8x128xf32>
    %6 = tpu.matmul %4, %5, %cst {dimension_numbers = #tpu.dot_dimension_numbers<[1], [0], [0], [1], [0, 0, 1, 1], [], []>} : vector<8x128xbf16>, vector<128x128xbf16>, vector<8x128xf32> -> vector<8x128xf32>
    %c0_4 = arith.constant 0 : index
    %c0_5 = arith.constant 0 : index
    %7 = vector.load %arg4[%c0_4, %c0_5] : memref<1x128xf32, #tpu.memory_space<vmem>>, vector<1x128xf32>
    %8 = vector.broadcast %7 : vector<1x128xf32> to vector<8x128xf32>
    %9 = arith.addf %6, %8 : vector<8x128xf32>
    %cst_6 = arith.constant 5.000000e-01 : f32
    %10 = vector.broadcast %cst_6 : f32 to vector<8x128xf32>
    %11 = arith.mulf %10, %9 : vector<8x128xf32>
    %cst_7 = arith.constant 4.471500e-02 : f32
    %12 = vector.broadcast %cst_7 : f32 to vector<8x128xf32>
    %13 = arith.mulf %12, %9 : vector<8x128xf32>
    %14 = arith.mulf %13, %9 : vector<8x128xf32>
    %15 = arith.mulf %14, %9 : vector<8x128xf32>
    %16 = arith.addf %9, %15 : vector<8x128xf32>
    %cst_8 = arith.constant 0.797884583 : f32
    %17 = vector.broadcast %cst_8 : f32 to vector<8x128xf32>
    %18 = arith.mulf %17, %16 : vector<8x128xf32>
    %19 = math.tanh %18 : vector<8x128xf32>
    %cst_9 = arith.constant 1.000000e+00 : f32
    %20 = vector.broadcast %cst_9 : f32 to vector<8x128xf32>
    %21 = arith.addf %20, %19 : vector<8x128xf32>
    %22 = arith.mulf %11, %21 : vector<8x128xf32>
    %c0_10 = arith.constant 0 : index
    %c0_11 = arith.constant 0 : index
    %23 = vector.load %arg8[%c0_10, %c0_11] : memref<8x128xf32, #tpu.memory_space<vmem>>, vector<8x128xf32>
    %24 = arith.truncf %22 : vector<8x128xf32> to vector<8x128xbf16>
    %c0_12 = arith.constant 0 : index
    %c0_13 = arith.constant 0 : index
    %25 = vector.load %arg5[%c0_12, %c0_13] : memref<128x128xbf16, #tpu.memory_space<vmem>>, vector<128x128xbf16>
    %cst_14 = arith.constant dense<0.000000e+00> : vector<8x128xf32>
    %26 = tpu.matmul %24, %25, %cst_14 {dimension_numbers = #tpu.dot_dimension_numbers<[1], [0], [0], [1], [0, 0, 1, 1], [], []>} : vector<8x128xbf16>, vector<128x128xbf16>, vector<8x128xf32> -> vector<8x128xf32>
    %27 = arith.addf %23, %26 : vector<8x128xf32>
    %c0_15 = arith.constant 0 : index
    %c0_16 = arith.constant 0 : index
    %28 = vector.load %arg8[%c0_15, %c0_16] : memref<8x128xf32, #tpu.memory_space<vmem>>, vector<8x128xf32>
    tpu.vector_store %arg8[%c0_15, %c0_16], %27 {strides = array<i32>} : memref<8x128xf32, #tpu.memory_space<vmem>>, vector<8x128xf32>,
    %c1_i32 = arith.constant 1 : i32
    %29 = arith.cmpi eq, %arg1, %c1_i32 : i32
    %30 = arith.extui %29 : i1 to i32
    %c0_i32_17 = arith.constant 0 : i32
    %31 = arith.cmpi ne, %30, %c0_i32_17 : i32
    scf.if %31 {
      %c0_18 = arith.constant 0 : index
      %c0_19 = arith.constant 0 : index
      %32 = vector.load %arg8[%c0_18, %c0_19] : memref<8x128xf32, #tpu.memory_space<vmem>>, vector<8x128xf32>
      %c0_20 = arith.constant 0 : index
      %c0_21 = arith.constant 0 : index
      %33 = vector.load %arg6[%c0_20, %c0_21] : memref<1x128xf32, #tpu.memory_space<vmem>>, vector<1x128xf32>
      %34 = vector.broadcast %33 : vector<1x128xf32> to vector<8x128xf32>
      %35 = arith.addf %32, %34 : vector<8x128xf32>
      %c0_22 = arith.constant 0 : index
      %c0_23 = arith.constant 0 : index
      %36 = vector.load %arg7[%c0_22, %c0_23] : memref<8x128xf32, #tpu.memory_space<vmem>>, vector<8x128xf32>
      tpu.vector_store %arg7[%c0_22, %c0_23], %35 {strides = array<i32>} : memref<8x128xf32, #tpu.memory_space<vmem>>, vector<8x128xf32>,
    } else {
    }
    return
  }
  func.func @transform_0(%arg0: i32, %arg1: i32) -> (i32, i32) {
    %c0_i32 = arith.constant 0 : i32
    %c0_i32_0 = arith.constant 0 : i32
    return %arg0, %c0_i32 : i32, i32
  }
  func.func @transform_1(%arg0: i32, %arg1: i32) -> (i32, i32) {
    %c0_i32 = arith.constant 0 : i32
    %c0_i32_0 = arith.constant 0 : i32
    return %c0_i32, %arg1 : i32, i32
  }
  func.func @transform_2(%arg0: i32, %arg1: i32) -> (i32, i32) {
    %c0_i32 = arith.constant 0 : i32
    %c0_i32_0 = arith.constant 0 : i32
    return %c0_i32, %arg1 : i32, i32
  }
  func.func @transform_3(%arg0: i32, %arg1: i32) -> (i32, i32) {
    %c0_i32 = arith.constant 0 : i32
    %c0_i32_0 = arith.constant 0 : i32
    return %arg1, %c0_i32 : i32, i32
  }
  func.func @transform_4(%arg0: i32, %arg1: i32) -> (i32, i32) {
    %c0_i32 = arith.constant 0 : i32
    %c0_i32_0 = arith.constant 0 : i32
    %c0_i32_1 = arith.constant 0 : i32
    return %c0_i32, %c0_i32_0 : i32, i32
  }
  func.func @transform_5(%arg0: i32, %arg1: i32) -> (i32, i32) {
    %c0_i32 = arith.constant 0 : i32
    %c0_i32_0 = arith.constant 0 : i32
    return %arg0, %c0_i32 : i32, i32
  }
}

</mosaic_0001>

<llo_original>
// kernel: siglip_mlp.1
$region0: #{siglip_mlp.1}
  #allocation0 [shape = 'u32[]', space=smem, size = 0x4, offset = 0x4, fixed_abs, tag = 'smem constant byte address 0x4 - core index']
  #allocation1 [shape = 'u32[144,128]{1,0:T(1,128)}', space=vmem, size = 0x12000, scoped, tag = 'internal scratch']
  #allocation2 [shape = 'f32[8,128]{1,0:T(8,128)}', space=vmem, size = 0x1000, scoped, tag = 'scratch operand']
  %s0 = inlined_call_operand.vmem [shape: f32[16,128], index: 0, kind: input, shape index: {}]
  %s1 = inlined_call_operand.vmem [shape: bf16[128,256], index: 1, kind: input, shape index: {}]
  %s2 = inlined_call_operand.vmem [shape: f32[1,256], index: 2, kind: input, shape index: {}]
  %s3 = inlined_call_operand.vmem [shape: bf16[256,128], index: 3, kind: input, shape index: {}]
  %s4 = inlined_call_operand.vmem [shape: f32[1,128], index: 4, kind: input, shape index: {}]
  %s5 = inlined_call_operand.hbm [shape: f32[16,128], index: 5, kind: output, shape index: {}]
  %s6 = sld [smem:[#allocation0]]
  $region102: #{siglip_mlp.1} parent=0
    _
  %s8 = ssub.s32 1, %s6
  %s9 = scalar_select 0, %s8, %s6
  $region1: #{siglip_mlp.1} parent=0
    #allocation3 [shape = 'u8[65536]{0}', space=vmem, size = 0x10000, scoped, tag = 'input window, operand 1']
    #allocation4 [shape = 'u8[8192]{0}', space=vmem, size = 0x2000, scoped, tag = 'output window, operand 0']
    #allocation5 [shape = 's32[2]{0}', space=sflag, size = 0x8, scoped, tag = 'scoped memory for siglip_mlp.1']
    %10 = vsyncpa [#allocation5], 0
    %s11 = scalar_lea.sflag [#allocation5], 1
    %12 = vsyncpa %s11, 0
    loop: start=0, step=1, limit=6
    $region2: #{siglip_mlp.1} parent=1 // loop_pre_header
      _
    $region3: #{siglip_mlp.1} parent=1 // loop_header
      %s14 = sphi 0, %s18
      %p15 = scmp.ge.s32.totalorder %s14, 6
      %s21 = sphi 0, %s33
      %s22 = sphi 0, %s29
      %s23 = sphi 0, %s21
      %s24 = sphi 0, %s22
      %s25 = sphi 0, %s23
      %s26 = sphi 0, %s24
      %s36 = sphi 0, %s38
      %s39 = sphi 0, %s36
      %s40 = sphi 0, %s39
      %s56 = sphi 0, %s40
      %s62 = sphi 0, %s64
      %s65 = sphi 0, %s62
      %s66 = sphi 0, %s65
      %s82 = sphi 0, %s66
      %s88 = sphi 0, %s90
      %s91 = sphi 0, %s88
      %s92 = sphi 0, %s91
      %s108 = sphi 0, %s92
      %s114 = sphi 0, %s116
      %s117 = sphi 0, %s114
      %s118 = sphi 0, %s117
      %s134 = sphi 0, %s118
      %s138 = sphi 0, %s138
      %s140 = sphi 0, %s138
      %s141 = sphi 0, %s140
      %s155 = sphi 0, %s141
      %s161 = sphi 0, %s163
      %s164 = sphi 0, %s161
      %s165 = sphi 0, %s164
      %s181 = sphi 0, %s165
    $region4: #{siglip_mlp.1} parent=1 // loop_header_branch
      %17 = sbr.rel (%p15) target = $region8
    $region5: #{siglip_mlp.1} parent=1 // loop_body
      %s19 = ssub.s32 %s14, 1
      %s20 = ssub.s32 %s14, 2
      %s27 = sadd.s32 1, %s22
      %p28 = scmp.ge.s32.totalorder %s27, 2
      %s29 = scalar_select %p28, 0, %s27
      %s30 = sadd.s32 1, %s21
      %s31 = scalar_select %p28, %s30, %s21
      %p32 = scmp.ge.s32.totalorder %s31, 2
      %s33 = scalar_select %p32, 0, %s31
      %s34 = ssub.s32 %s21, %s33
      %p35 = scmp.eq.s32.totalorder %s34, 0
      %s37 = sadd.s32 %s36, 1
      %s38 = scalar_select %p35, %s36, %s37
      %p41 = pneg %p35
      %p42 = scmp.eq.s32.totalorder %s14, 3
      %p43 = por %p41, %p42
      %p44 = scmp.ne.s32.totalorder %s36, %s39
      %p45 = scmp.eq.s32.totalorder %s14, 0
      %p46 = por %p44, %p45
      %p47 = scmp.ne.s32.totalorder %s36, %s39
      %p48 = scmp.eq.s32.totalorder %s19, 3
      %p49 = por %p47, %p48
      %p50 = scmp.ne.s32.totalorder %s39, %s40
      %p51 = scmp.eq.s32.totalorder %s19, 0
      %p52 = por %p50, %p51
      %p53 = scmp.ne.s32.totalorder %s39, %s40
      %p54 = scmp.eq.s32.totalorder %s20, 3
      %p55 = por %p53, %p54
      %p57 = scmp.ne.s32.totalorder %s40, %s56
      %p58 = scmp.eq.s32.totalorder %s20, 0
      %p59 = por %p57, %p58
      %s60 = ssub.s32 %s22, %s29
      %p61 = scmp.eq.s32.totalorder %s60, 0
      %s63 = sadd.s32 %s62, 1
      %s64 = scalar_select %p61, %s62, %s63
      %p67 = pneg %p61
      %p68 = scmp.eq.s32.totalorder %s14, 3
      %p69 = por %p67, %p68
      %p70 = scmp.ne.s32.totalorder %s62, %s65
      %p71 = scmp.eq.s32.totalorder %s14, 0
      %p72 = por %p70, %p71
      %p73 = scmp.ne.s32.totalorder %s62, %s65
      %p74 = scmp.eq.s32.totalorder %s19, 3
      %p75 = por %p73, %p74
      %p76 = scmp.ne.s32.totalorder %s65, %s66
      %p77 = scmp.eq.s32.totalorder %s19, 0
      %p78 = por %p76, %p77
      %p79 = scmp.ne.s32.totalorder %s65, %s66
      %p80 = scmp.eq.s32.totalorder %s20, 3
      %p81 = por %p79, %p80
      %p83 = scmp.ne.s32.totalorder %s66, %s82
      %p84 = scmp.eq.s32.totalorder %s20, 0
      %p85 = por %p83, %p84
      %s86 = ssub.s32 %s22, %s29
      %p87 = scmp.eq.s32.totalorder %s86, 0
      %s89 = sadd.s32 %s88, 1
      %s90 = scalar_select %p87, %s88, %s89
      %p93 = pneg %p87
      %p94 = scmp.eq.s32.totalorder %s14, 3
      %p95 = por %p93, %p94
      %p96 = scmp.ne.s32.totalorder %s88, %s91
      %p97 = scmp.eq.s32.totalorder %s14, 0
      %p98 = por %p96, %p97
      %p99 = scmp.ne.s32.totalorder %s88, %s91
      %p100 = scmp.eq.s32.totalorder %s19, 3
      %p101 = por %p99, %p100
      %p102 = scmp.ne.s32.totalorder %s91, %s92
      %p103 = scmp.eq.s32.totalorder %s19, 0
      %p104 = por %p102, %p103
      %p105 = scmp.ne.s32.totalorder %s91, %s92
      %p106 = scmp.eq.s32.totalorder %s20, 3
      %p107 = por %p105, %p106
      %p109 = scmp.ne.s32.totalorder %s92, %s108
      %p110 = scmp.eq.s32.totalorder %s20, 0
      %p111 = por %p109, %p110
      %s112 = ssub.s32 %s22, %s29
      %p113 = scmp.eq.s32.totalorder %s112, 0
      %s115 = sadd.s32 %s114, 1
      %s116 = scalar_select %p113, %s114, %s115
      %p119 = pneg %p113
      %p120 = scmp.eq.s32.totalorder %s14, 3
      %p121 = por %p119, %p120
      %p122 = scmp.ne.s32.totalorder %s114, %s117
      %p123 = scmp.eq.s32.totalorder %s14, 0
      %p124 = por %p122, %p123
      %p125 = scmp.ne.s32.totalorder %s114, %s117
      %p126 = scmp.eq.s32.totalorder %s19, 3
      %p127 = por %p125, %p126
      %p128 = scmp.ne.s32.totalorder %s117, %s118
      %p129 = scmp.eq.s32.totalorder %s19, 0
      %p130 = por %p128, %p129
      %p131 = scmp.ne.s32.totalorder %s117, %s118
      %p132 = scmp.eq.s32.totalorder %s20, 3
      %p133 = por %p131, %p132
      %p135 = scmp.ne.s32.totalorder %s118, %s134
      %p136 = scmp.eq.s32.totalorder %s20, 0
      %p137 = por %p135, %p136
      %s139 = sadd.s32 %s138, 1
      %p142 = scmp.eq.s32.totalorder %s14, 3
      %p143 = scmp.ne.s32.totalorder %s138, %s140
      %p144 = scmp.eq.s32.totalorder %s14, 0
      %p145 = por %p143, %p144
      %p146 = scmp.ne.s32.totalorder %s138, %s140
      %p147 = scmp.eq.s32.totalorder %s19, 3
      %p148 = por %p146, %p147
      %p149 = scmp.ne.s32.totalorder %s140, %s141
      %p150 = scmp.eq.s32.totalorder %s19, 0
      %p151 = por %p149, %p150
      %p152 = scmp.ne.s32.totalorder %s140, %s141
      %p153 = scmp.eq.s32.totalorder %s20, 3
      %p154 = por %p152, %p153
      %p156 = scmp.ne.s32.totalorder %s141, %s155
      %p157 = scmp.eq.s32.totalorder %s20, 0
      %p158 = por %p156, %p157
      %s159 = ssub.s32 %s21, %s33
      %p160 = scmp.eq.s32.totalorder %s159, 0
      %s162 = sadd.s32 %s161, 1
      %s163 = scalar_select %p160, %s161, %s162
      %p166 = pneg %p160
      %p167 = scmp.eq.s32.totalorder %s14, 3
      %p168 = por %p166, %p167
      %p169 = scmp.ne.s32.totalorder %s161, %s164
      %p170 = scmp.eq.s32.totalorder %s14, 0
      %p171 = por %p169, %p170
      %p172 = scmp.ne.s32.totalorder %s161, %s164
      %p173 = scmp.eq.s32.totalorder %s19, 3
      %p174 = por %p172, %p173
      %p175 = scmp.ne.s32.totalorder %s164, %s165
      %p176 = scmp.eq.s32.totalorder %s19, 0
      %p177 = por %p175, %p176
      %p178 = scmp.ne.s32.totalorder %s164, %s165
      %p179 = scmp.eq.s32.totalorder %s20, 3
      %p180 = por %p178, %p179
      %p182 = scmp.ne.s32.totalorder %s165, %s181
      %p183 = scmp.eq.s32.totalorder %s20, 0
      %p184 = por %p182, %p183
      %p185 = scmp.le.s32.totalorder 1, %s14
      %p186 = scmp.lt.s32.totalorder %s14, 5
      %p187 = pnand %p185, %p186
      %p188 = pneg %p187
      // Predicated region
      $region9: #{siglip_mlp.1} parent=5 // pred_check
        _
      $region10: #{siglip_mlp.1} parent=5 // pred_check_branch
        %190 = sbr.rel (%p187) target = $region12
      $region11: #{siglip_mlp.1} parent=5 // pred_region
        %s191 = ssub.s32 %s14, 1
        // Predicated region
        $region13: #{siglip_mlp.1} parent=11 // pred_check
          %p192 = pneg %p151
        $region14: #{siglip_mlp.1} parent=11 // pred_check_branch
          %194 = sbr.rel (%p192) target = $region16
        $region15: #{siglip_mlp.1} parent=11 // pred_region
          _
        $region16: #{siglip_mlp.1} parent=11 // pred_fallthru
          _
      $region12: #{siglip_mlp.1} parent=5 // pred_fallthru
        _
      %p195 = scmp.lt.s32.totalorder %s14, 4
      // Predicated region
      $region17: #{siglip_mlp.1} parent=5 // pred_check
        %p196 = pneg %p195
      $region18: #{siglip_mlp.1} parent=5 // pred_check_branch
        %198 = sbr.rel (%p196) target = $region20
      $region19: #{siglip_mlp.1} parent=5 // pred_region
        // Predicated region
        $region21: #{siglip_mlp.1} parent=19 // pred_check
          %p199 = pneg %p46
        $region22: #{siglip_mlp.1} parent=19 // pred_check_branch
          %201 = sbr.rel (%p199) target = $region24
        $region23: #{siglip_mlp.1} parent=19 // pred_region
          %p202 = scmp.lt.s32.totalorder %s21, 1
          %s203 = scalar_select %p202, %s21, 1
          %s204 = smul.addr %s203, 8
          %s205 = scalar_lea.vmem %s0, %s204
        $region24: #{siglip_mlp.1} parent=19 // pred_fallthru
          _
        // Predicated region
        $region25: #{siglip_mlp.1} parent=19 // pred_check
          %p206 = pneg %p72
        $region26: #{siglip_mlp.1} parent=19 // pred_check_branch
          %208 = sbr.rel (%p206) target = $region28
        $region27: #{siglip_mlp.1} parent=19 // pred_region
          %s209 = sand.u32 %s62, 1
          %s210 = sand.u32 %s62, 1
          %s211 = smul.addr %s210, 64
          %s212 = scalar_lea.vmem [#allocation3], %s211
          %s213 = smul.addr %s22, 4
          %s214 = scalar_lea.vmem %s1, %s213
          // Predicated region
          $region29: #{siglip_mlp.1} parent=27 // pred_check
            _
          $region30: #{siglip_mlp.1} parent=27 // pred_check_branch
            %216 = sbr.rel (0) target = $region32
          $region31: #{siglip_mlp.1} parent=27 // pred_region
            // Predicated region
            $region33: #{siglip_mlp.1} parent=31 // pred_check
              _
            $region34: #{siglip_mlp.1} parent=31 // pred_check_branch
              %218 = sbr.rel target = $region36
            $region35: #{siglip_mlp.1} parent=31 // pred_region
              // Predicated region
              $region48: #{siglip_mlp.1} parent=35 // pred_check
                _
              $region49: #{siglip_mlp.1} parent=35 // pred_check_branch
                %263 = sbr.rel (0) target = $region51
              $region50: #{siglip_mlp.1} parent=35 // pred_region
                loop: start=0, step=1, limit=1
                $region52: #{siglip_mlp.1} parent=50 // loop_pre_header
                  _
                $region53: #{siglip_mlp.1} parent=50 // loop_header
                  %s265 = sphi 0, %s269
                  %p266 = scmp.ge.s32.totalorder %s265, 1
                  %s270 = sphi %s214, %s214
                  %s271 = sphi %s212, %s212
                $region54: #{siglip_mlp.1} parent=50 // loop_header_branch
                  %268 = sbr.rel (%p266) target = $region58
                $region55: #{siglip_mlp.1} parent=50 // loop_body
                  _
                $region56: #{siglip_mlp.1} parent=50 // loop_footer
                  %s269 = sadd.s32 1, %s265
                $region57: #{siglip_mlp.1} parent=50 // loop_footer_branch
                  %264 = sbr.rel target = $region53
                $region58: #{siglip_mlp.1} parent=50 // loop_exit
                  _
                loop: start=0, step=1, limit=1
                $region59: #{siglip_mlp.1} parent=50 // loop_pre_header
                  _
                $region60: #{siglip_mlp.1} parent=50 // loop_header
                  %s274 = sphi 0, %s278
                  %p275 = scmp.ge.s32.totalorder %s274, 1
                  %s279 = sphi %s214, %s214
                  %s280 = sphi %s212, %s212
                $region61: #{siglip_mlp.1} parent=50 // loop_header_branch
                  %277 = sbr.rel (%p275) target = $region65
                $region62: #{siglip_mlp.1} parent=50 // loop_body
                  %v281 = vld [vmem:[%s279] sm:$0xf]
                  %282 = vst [vmem:[%s280] sm:$0xf] %v281
                  %v283 = vld [vmem:[%s279 + $0x8] sm:$0xf]
                  %284 = vst [vmem:[%s280 + $0x4] sm:$0xf] %v283
                  %v285 = vld [vmem:[%s279 + $0x10] sm:$0xf]
                  %286 = vst [vmem:[%s280 + $0x8] sm:$0xf] %v285
                  %v287 = vld [vmem:[%s279 + $0x18] sm:$0xf]
                  %288 = vst [vmem:[%s280 + $0xc] sm:$0xf] %v287
                  %v289 = vld [vmem:[%s279 + $0x20] sm:$0xf]
                  %290 = vst [vmem:[%s280 + $0x10] sm:$0xf] %v289
                  %v291 = vld [vmem:[%s279 + $0x28] sm:$0xf]
                  %292 = vst [vmem:[%s280 + $0x14] sm:$0xf] %v291
                  %v293 = vld [vmem:[%s279 + $0x30] sm:$0xf]
                  %294 = vst [vmem:[%s280 + $0x18] sm:$0xf] %v293
                  %v295 = vld [vmem:[%s279 + $0x38] sm:$0xf]
                  %296 = vst [vmem:[%s280 + $0x1c] sm:$0xf] %v295
                  %v297 = vld [vmem:[%s279 + $0x40] sm:$0xf]
                  %298 = vst [vmem:[%s280 + $0x20] sm:$0xf] %v297
                  %v299 = vld [vmem:[%s279 + $0x48] sm:$0xf]
                  %300 = vst [vmem:[%s280 + $0x24] sm:$0xf] %v299
                  %v301 = vld [vmem:[%s279 + $0x50] sm:$0xf]
                  %302 = vst [vmem:[%s280 + $0x28] sm:$0xf] %v301
                  %v303 = vld [vmem:[%s279 + $0x58] sm:$0xf]
                  %304 = vst [vmem:[%s280 + $0x2c] sm:$0xf] %v303
                  %v305 = vld [vmem:[%s279 + $0x60] sm:$0xf]
                  %306 = vst [vmem:[%s280 + $0x30] sm:$0xf] %v305
                  %v307 = vld [vmem:[%s279 + $0x68] sm:$0xf]
                  %308 = vst [vmem:[%s280 + $0x34] sm:$0xf] %v307
                  %v309 = vld [vmem:[%s279 + $0x70] sm:$0xf]
                  %310 = vst [vmem:[%s280 + $0x38] sm:$0xf] %v309
                  %v311 = vld [vmem:[%s279 + $0x78] sm:$0xf]
                  %312 = vst [vmem:[%s280 + $0x3c] sm:$0xf] %v311
                $region63: #{siglip_mlp.1} parent=50 // loop_footer
                  %s278 = sadd.s32 1, %s274
                $region64: #{siglip_mlp.1} parent=50 // loop_footer_branch
                  %273 = sbr.rel target = $region60
                $region65: #{siglip_mlp.1} parent=50 // loop_exit
                  _
              $region51: #{siglip_mlp.1} parent=35 // pred_fallthru
                _
            $region36: #{siglip_mlp.1} parent=31 // pred_fallthru
              _
            // Predicated region
            $region37: #{siglip_mlp.1} parent=31 // pred_check
              _
            $region38: #{siglip_mlp.1} parent=31 // pred_check_branch
              %220 = sbr.rel (0) target = $region40
            $region39: #{siglip_mlp.1} parent=31 // pred_region
              loop: start=0, step=1, limit=1
              $region41: #{siglip_mlp.1} parent=39 // loop_pre_header
                _
              $region42: #{siglip_mlp.1} parent=39 // loop_header
                %s223 = sphi 0, %s227
                %p224 = scmp.ge.s32.totalorder %s223, 1
                %s228 = sphi %s214, %s214
                %s229 = sphi %s212, %s212
              $region43: #{siglip_mlp.1} parent=39 // loop_header_branch
                %226 = sbr.rel (%p224) target = $region47
              $region44: #{siglip_mlp.1} parent=39 // loop_body
                %v230 = vld [vmem:[%s228] sm:$0xf]
                %231 = vst [vmem:[%s229] sm:$0xf] %v230
                %v232 = vld [vmem:[%s228 + $0x8] sm:$0xf]
                %233 = vst [vmem:[%s229 + $0x4] sm:$0xf] %v232
                %v234 = vld [vmem:[%s228 + $0x10] sm:$0xf]
                %235 = vst [vmem:[%s229 + $0x8] sm:$0xf] %v234
                %v236 = vld [vmem:[%s228 + $0x18] sm:$0xf]
                %237 = vst [vmem:[%s229 + $0xc] sm:$0xf] %v236
                %v238 = vld [vmem:[%s228 + $0x20] sm:$0xf]
                %239 = vst [vmem:[%s229 + $0x10] sm:$0xf] %v238
                %v240 = vld [vmem:[%s228 + $0x28] sm:$0xf]
                %241 = vst [vmem:[%s229 + $0x14] sm:$0xf] %v240
                %v242 = vld [vmem:[%s228 + $0x30] sm:$0xf]
                %243 = vst [vmem:[%s229 + $0x18] sm:$0xf] %v242
                %v244 = vld [vmem:[%s228 + $0x38] sm:$0xf]
                %245 = vst [vmem:[%s229 + $0x1c] sm:$0xf] %v244
                %v246 = vld [vmem:[%s228 + $0x40] sm:$0xf]
                %247 = vst [vmem:[%s229 + $0x20] sm:$0xf] %v246
                %v248 = vld [vmem:[%s228 + $0x48] sm:$0xf]
                %249 = vst [vmem:[%s229 + $0x24] sm:$0xf] %v248
                %v250 = vld [vmem:[%s228 + $0x50] sm:$0xf]
                %251 = vst [vmem:[%s229 + $0x28] sm:$0xf] %v250
                %v252 = vld [vmem:[%s228 + $0x58] sm:$0xf]
                %253 = vst [vmem:[%s229 + $0x2c] sm:$0xf] %v252
                %v254 = vld [vmem:[%s228 + $0x60] sm:$0xf]
                %255 = vst [vmem:[%s229 + $0x30] sm:$0xf] %v254
                %v256 = vld [vmem:[%s228 + $0x68] sm:$0xf]
                %257 = vst [vmem:[%s229 + $0x34] sm:$0xf] %v256
                %v258 = vld [vmem:[%s228 + $0x70] sm:$0xf]
                %259 = vst [vmem:[%s229 + $0x38] sm:$0xf] %v258
                %v260 = vld [vmem:[%s228 + $0x78] sm:$0xf]
                %261 = vst [vmem:[%s229 + $0x3c] sm:$0xf] %v260
              $region45: #{siglip_mlp.1} parent=39 // loop_footer
                %s227 = sadd.s32 1, %s223
              $region46: #{siglip_mlp.1} parent=39 // loop_footer_branch
                %222 = sbr.rel target = $region42
              $region47: #{siglip_mlp.1} parent=39 // loop_exit
                _
            $region40: #{siglip_mlp.1} parent=31 // pred_fallthru
              _
          $region32: #{siglip_mlp.1} parent=27 // pred_fallthru
            _
          %313 = vnop
        $region28: #{siglip_mlp.1} parent=19 // pred_fallthru
          _
        // Predicated region
        $region66: #{siglip_mlp.1} parent=19 // pred_check
          %p314 = pneg %p98
        $region67: #{siglip_mlp.1} parent=19 // pred_check_branch
          %316 = sbr.rel (%p314) target = $region69
        $region68: #{siglip_mlp.1} parent=19 // pred_region
          %p317 = scmp.lt.s32.totalorder %s22, 1
          %s318 = scalar_select %p317, %s22, 1
          %s319 = scalar_lea.vmem %s2, %s318
        $region69: #{siglip_mlp.1} parent=19 // pred_fallthru
          _
        // Predicated region
        $region70: #{siglip_mlp.1} parent=19 // pred_check
          %p320 = pneg %p124
        $region71: #{siglip_mlp.1} parent=19 // pred_check_branch
          %322 = sbr.rel (%p320) target = $region73
        $region72: #{siglip_mlp.1} parent=19 // pred_region
          %s323 = smul.u32 16, %s22
          %p324 = scmp.lt.s32.totalorder %s323, 31
          %s325 = scalar_select %p324, %s323, 31
          %s326 = smul.addr %s325, 4
          %s327 = scalar_lea.vmem %s3, %s326
          %s328 = smul.u32 16, %s22
        $region73: #{siglip_mlp.1} parent=19 // pred_fallthru
          _
      $region20: #{siglip_mlp.1} parent=5 // pred_fallthru
        _
      %p329 = scmp.le.s32.totalorder 1, %s14
      %p330 = scmp.lt.s32.totalorder %s14, 5
      %p331 = pnand %p329, %p330
      %p332 = pneg %p331
      // Predicated region
      $region74: #{siglip_mlp.1} parent=5 // pred_check
        _
      $region75: #{siglip_mlp.1} parent=5 // pred_check_branch
        %334 = sbr.rel (%p331) target = $region77
      $region76: #{siglip_mlp.1} parent=5 // pred_region
        %s335 = ssub.s32 %s14, 1
        %s336 = sand.u32 %s65, 1
        %s337 = sand.u32 %s65, 1
        %s338 = smul.addr %s337, 64
        %s339 = scalar_lea.vmem [#allocation3], %s338
        // Predicated region
        $region78: #{siglip_mlp.1} parent=76 // pred_check
          %p340 = pneg %p78
        $region79: #{siglip_mlp.1} parent=76 // pred_check_branch
          %342 = sbr.rel (%p340) target = $region81
        $region80: #{siglip_mlp.1} parent=76 // pred_region
          _
        $region81: #{siglip_mlp.1} parent=76 // pred_fallthru
          _
        %p343 = scmp.lt.s32.totalorder %s23, 1
        %s344 = scalar_select %p343, %s23, 1
        %s345 = smul.addr %s344, 8
        %s346 = scalar_lea.vmem %s0, %s345
        %p347 = pneg %p52
        %p348 = pneg %p49
        %s349 = sand.u32 %s65, 1
        %s350 = sand.u32 %s65, 1
        %s351 = smul.addr %s350, 64
        %s352 = scalar_lea.vmem [#allocation3], %s351
        %p353 = pneg %p78
        %p354 = pneg %p75
        %p355 = scmp.lt.s32.totalorder %s24, 1
        %s356 = scalar_select %p355, %s24, 1
        %s357 = scalar_lea.vmem %s2, %s356
        %p358 = pneg %p104
        %p359 = pneg %p101
        %s360 = smul.u32 16, %s24
        %p361 = scmp.lt.s32.totalorder %s360, 31
        %s362 = scalar_select %p361, %s360, 31
        %s363 = smul.addr %s362, 4
        %s364 = scalar_lea.vmem %s3, %s363
        %p365 = pneg %p130
        %p366 = pneg %p127
        %p367 = pneg %p151
        %p368 = pneg %p148
        %p369 = pneg %p177
        %p370 = pneg %p174
        %s371 = sand.u32 %s164, 1
        %s372 = scalar_lea.sflag [#allocation5], %s371
        %s373 = sand.u32 %s164, 1
        %s374 = smul.addr %s373, 8
        %s375 = scalar_lea.vmem [#allocation4], %s374
        %p376 = scmp.lt.s32.totalorder %s23, 1
        %s377 = scalar_select %p376, %s23, 1
        %s378 = smul.addr %s377, 8
        %s379 = scalar_lea.vmem %s0, %s378
        %p380 = scmp.lt.s32.totalorder %s24, 1
        %s381 = scalar_select %p380, %s24, 1
        %s382 = scalar_lea.vmem %s2, %s381
        %s383 = smul.u32 16, %s24
        %p384 = scmp.lt.s32.totalorder %s383, 31
        %s385 = scalar_select %p384, %s383, 31
        %s386 = smul.addr %s385, 4
        %s387 = scalar_lea.vmem %s3, %s386
        %s388 = smul.u32 16, %s24
        %p390 = scmp.eq.s32.totalorder %s24, 0
        // Predicated region
        $region82: #{siglip_mlp.1} parent=76 // pred_check
          %p391 = pneg %p390
        $region83: #{siglip_mlp.1} parent=76 // pred_check_branch
          %393 = sbr.rel (%p391) target = $region85
        $region84: #{siglip_mlp.1} parent=76 // pred_region
          %394 = vst [vmem:[#allocation2] sm:$0xff] 0.0
        $region85: #{siglip_mlp.1} parent=76 // pred_fallthru
          _
        %v395 = vld [vmem:[%s379] sm:$0xff]
        %v396 = vpack.c.bf16 %v395, %v395
        %v397 = vld [vmem:[%s339] sm:$0xf]
        %v398 = vld [vmem:[%s339 + $0x4] sm:$0xf]
        %v399 = vld [vmem:[%s339 + $0x8] sm:$0xf]
        %v400 = vld [vmem:[%s339 + $0xc] sm:$0xf]
        %v401 = vld [vmem:[%s339 + $0x10] sm:$0xf]
        %v402 = vld [vmem:[%s339 + $0x14] sm:$0xf]
        %v403 = vld [vmem:[%s339 + $0x18] sm:$0xf]
        %v404 = vld [vmem:[%s339 + $0x1c] sm:$0xf]
        %v405 = vld [vmem:[%s339 + $0x20] sm:$0xf]
        %v406 = vld [vmem:[%s339 + $0x24] sm:$0xf]
        %v407 = vld [vmem:[%s339 + $0x28] sm:$0xf]
        %v408 = vld [vmem:[%s339 + $0x2c] sm:$0xf]
        %v409 = vld [vmem:[%s339 + $0x30] sm:$0xf]
        %v410 = vld [vmem:[%s339 + $0x34] sm:$0xf]
        %v411 = vld [vmem:[%s339 + $0x38] sm:$0xf]
        %v412 = vld [vmem:[%s339 + $0x3c] sm:$0xf]
        %v413 = vld [vmem:[%s382] sm:$0x1]
        %v415 = vlaneseq
        %v416 = vshrl.u32 %v415, 7
        %v417 = vsub.s32 0, %v416
        %v418 = vrot.slane %v413, %v417
        %v436 = vunpack.c.l.b16 %v397
        %v437 = vunpack.c.l.b16 %v398
        %v438 = vunpack.c.l.b16 %v399
        %v439 = vunpack.c.l.b16 %v400
        %v440 = vunpack.c.l.b16 %v401
        %v441 = vunpack.c.l.b16 %v402
        %v442 = vunpack.c.l.b16 %v403
        %v443 = vunpack.c.l.b16 %v404
        %v444 = vunpack.c.l.b16 %v405
        %v445 = vunpack.c.l.b16 %v406
        %v446 = vunpack.c.l.b16 %v407
        %v447 = vunpack.c.l.b16 %v408
        %v448 = vunpack.c.l.b16 %v409
        %v449 = vunpack.c.l.b16 %v410
        %v450 = vunpack.c.l.b16 %v411
        %v451 = vunpack.c.l.b16 %v412
        %v452 = vpack.c.b16 %v437, %v436
        %v453 = vpack.c.b16 %v439, %v438
        %v454 = vpack.c.b16 %v441, %v440
        %v455 = vpack.c.b16 %v443, %v442
        %v456 = vpack.c.b16 %v445, %v444
        %v457 = vpack.c.b16 %v447, %v446
        %v458 = vpack.c.b16 %v449, %v448
        %v459 = vpack.c.b16 %v451, %v450
        %468 = vmatprep.subr.bf16.mxu0 0
        %469 = vmatpush1.bf16.msra.mxu0 %v452
        %470 = vmatprep.subr.bf16.mxu0 0
        %471 = vmatpush1.bf16.msra.mxu0 %v453
        %472 = vmatprep.subr.bf16.mxu0 0
        %473 = vmatpush1.bf16.msra.mxu0 %v454
        %474 = vmatprep.subr.bf16.mxu0 0
        %475 = vmatpush1.bf16.msra.mxu0 %v455
        %476 = vmatprep.subr.bf16.mxu0 0
        %477 = vmatpush1.bf16.msra.mxu0 %v456
        %478 = vmatprep.subr.bf16.mxu0 0
        %479 = vmatpush1.bf16.msra.mxu0 %v457
        %480 = vmatprep.subr.bf16.mxu0 0
        %481 = vmatpush1.bf16.msra.mxu0 %v458
        %482 = vmatprep.subr.bf16.mxu0 0
        %483 = vmatpush1.bf16.msra.mxu0 %v459
        %484 = vmatprep.subr.bf16.mxu0 0
        %485 = vmatpush1.bf16.msra.mxu0 0
        %486 = vmatprep.subr.bf16.mxu0 0
        %487 = vmatpush1.bf16.msra.mxu0 0
        %488 = vmatprep.subr.bf16.mxu0 0
        %489 = vmatpush1.bf16.msra.mxu0 0
        %490 = vmatprep.subr.bf16.mxu0 0
        %491 = vmatpush1.bf16.msra.mxu0 0
        %492 = vmatprep.subr.bf16.mxu0 0
        %493 = vmatpush1.bf16.msra.mxu0 0
        %494 = vmatprep.subr.bf16.mxu0 0
        %495 = vmatpush1.bf16.msra.mxu0 0
        %496 = vmatprep.subr.bf16.mxu0 0
        %497 = vmatpush1.bf16.msra.mxu0 0
        %498 = vmatprep.subr.bf16.mxu0 0
        %499 = vmatpush1.bf16.msra.mxu0 0
        %500 = vmatprep.mubr.bf16.mxu0 0
        %501 = vmatmul.mubr.bf16.gmra.mrb[0].mxu0 %v396
        %v502 = vpop.f32.mrb[0].mxu0
        %v503 = vadd.f32 %v418, %v502
        %v504 = vpop.f32.mrb[0].mxu0
        %v505 = vpop.f32.mrb[0].mxu0
        %v506 = vpop.f32.mrb[0].mxu0
        %507 = vdwg.mxu0
        %v508 = vmul.f32 %v503, 0.5
        %v509 = vmul.f32 %v503, 0.044715
        %v510 = vmul.f32 %v509, %v503
        %v511 = vmul.f32 %v510, %v503
        %v512 = vadd.f32 %v503, %v511
        %v513 = vmul.f32 %v512, 0.7978846
        %v514 = vtanh.pop %v513
        %v515 = vadd.f32 %v514, 1.0
        %v516 = vmul.f32 %v508, %v515
        %v517 = vld [vmem:[#allocation2] sm:$0xff]
        %v518 = vpack.c.bf16 %v516, %v516
        %v519 = vld [vmem:[%s387] sm:$0xf]
        %v520 = vld [vmem:[%s387 + $0x4] sm:$0xf]
        %v521 = vld [vmem:[%s387 + $0x8] sm:$0xf]
        %v522 = vld [vmem:[%s387 + $0xc] sm:$0xf]
        %v523 = vld [vmem:[%s387 + $0x10] sm:$0xf]
        %v524 = vld [vmem:[%s387 + $0x14] sm:$0xf]
        %v525 = vld [vmem:[%s387 + $0x18] sm:$0xf]
        %v526 = vld [vmem:[%s387 + $0x1c] sm:$0xf]
        %v527 = vld [vmem:[%s387 + $0x20] sm:$0xf]
        %v528 = vld [vmem:[%s387 + $0x24] sm:$0xf]
        %v529 = vld [vmem:[%s387 + $0x28] sm:$0xf]
        %v530 = vld [vmem:[%s387 + $0x2c] sm:$0xf]
        %v531 = vld [vmem:[%s387 + $0x30] sm:$0xf]
        %v532 = vld [vmem:[%s387 + $0x34] sm:$0xf]
        %v533 = vld [vmem:[%s387 + $0x38] sm:$0xf]
        %v534 = vld [vmem:[%s387 + $0x3c] sm:$0xf]
        %v551 = vunpack.c.l.b16 %v519
        %v552 = vunpack.c.l.b16 %v520
        %v553 = vunpack.c.l.b16 %v521
        %v554 = vunpack.c.l.b16 %v522
        %v555 = vunpack.c.l.b16 %v523
        %v556 = vunpack.c.l.b16 %v524
        %v557 = vunpack.c.l.b16 %v525
        %v558 = vunpack.c.l.b16 %v526
        %v559 = vunpack.c.l.b16 %v527
        %v560 = vunpack.c.l.b16 %v528
        %v561 = vunpack.c.l.b16 %v529
        %v562 = vunpack.c.l.b16 %v530
        %v563 = vunpack.c.l.b16 %v531
        %v564 = vunpack.c.l.b16 %v532
        %v565 = vunpack.c.l.b16 %v533
        %v566 = vunpack.c.l.b16 %v534
        %v567 = vpack.c.b16 %v552, %v551
        %v568 = vpack.c.b16 %v554, %v553
        %v569 = vpack.c.b16 %v556, %v555
        %v570 = vpack.c.b16 %v558, %v557
        %v571 = vpack.c.b16 %v560, %v559
        %v572 = vpack.c.b16 %v562, %v561
        %v573 = vpack.c.b16 %v564, %v563
        %v574 = vpack.c.b16 %v566, %v565
        %583 = vmatprep.subr.bf16.mxu0 0
        %584 = vmatpush1.bf16.msra.mxu0 %v567
        %585 = vmatprep.subr.bf16.mxu0 0
        %586 = vmatpush1.bf16.msra.mxu0 %v568
        %587 = vmatprep.subr.bf16.mxu0 0
        %588 = vmatpush1.bf16.msra.mxu0 %v569
        %589 = vmatprep.subr.bf16.mxu0 0
        %590 = vmatpush1.bf16.msra.mxu0 %v570
        %591 = vmatprep.subr.bf16.mxu0 0
        %592 = vmatpush1.bf16.msra.mxu0 %v571
        %593 = vmatprep.subr.bf16.mxu0 0
        %594 = vmatpush1.bf16.msra.mxu0 %v572
        %595 = vmatprep.subr.bf16.mxu0 0
        %596 = vmatpush1.bf16.msra.mxu0 %v573
        %597 = vmatprep.subr.bf16.mxu0 0
        %598 = vmatpush1.bf16.msra.mxu0 %v574
        %599 = vmatprep.subr.bf16.mxu0 0
        %600 = vmatpush1.bf16.msra.mxu0 0
        %601 = vmatprep.subr.bf16.mxu0 0
        %602 = vmatpush1.bf16.msra.mxu0 0
        %603 = vmatprep.subr.bf16.mxu0 0
        %604 = vmatpush1.bf16.msra.mxu0 0
        %605 = vmatprep.subr.bf16.mxu0 0
        %606 = vmatpush1.bf16.msra.mxu0 0
        %607 = vmatprep.subr.bf16.mxu0 0
        %608 = vmatpush1.bf16.msra.mxu0 0
        %609 = vmatprep.subr.bf16.mxu0 0
        %610 = vmatpush1.bf16.msra.mxu0 0
        %611 = vmatprep.subr.bf16.mxu0 0
        %612 = vmatpush1.bf16.msra.mxu0 0
        %613 = vmatprep.subr.bf16.mxu0 0
        %614 = vmatpush1.bf16.msra.mxu0 0
        %615 = vmatprep.mubr.bf16.mxu0 0
        %616 = vmatmul.mubr.bf16.gmra.mrb[0].mxu0 %v518
        %v617 = vpop.f32.mrb[0].mxu0
        %v618 = vadd.f32 0.0, %v617
        %v619 = vpop.f32.mrb[0].mxu0
        %v620 = vpop.f32.mrb[0].mxu0
        %v621 = vpop.f32.mrb[0].mxu0
        %622 = vdwg.mxu0
        %v623 = vadd.f32 %v517, %v618
        %624 = vst [vmem:[#allocation2] sm:$0xff] %v623
        %p625 = scmp.eq.s32.totalorder %s24, 1
        // Predicated region
        $region86: #{siglip_mlp.1} parent=76 // pred_check
          %p626 = pneg %p625
        $region87: #{siglip_mlp.1} parent=76 // pred_check_branch
          %628 = sbr.rel (%p626) target = $region89
        $region88: #{siglip_mlp.1} parent=76 // pred_region
          %v629 = vld [vmem:[#allocation2] sm:$0xff]
          %v630 = vld [vmem:[%s4] sm:$0x1]
          %v632 = vlaneseq
          %v633 = vshrl.u32 %v632, 7
          %v634 = vsub.s32 0, %v633
          %v635 = vrot.slane %v630, %v634
          %v637 = vadd.f32 %v629, %v635
          %638 = vst [vmem:[%s375] sm:$0xff] %v637
        $region89: #{siglip_mlp.1} parent=76 // pred_fallthru
          _
        %s639 = sand.u32 %s164, 1
        %s640 = scalar_lea.sflag [#allocation5], %s639
        %s641 = sand.u32 %s164, 1
        %s642 = smul.addr %s641, 8
        %s643 = scalar_lea.vmem [#allocation4], %s642
        // Predicated region
        $region90: #{siglip_mlp.1} parent=76 // pred_check
          %p644 = pneg %p174
        $region91: #{siglip_mlp.1} parent=76 // pred_check_branch
          %646 = sbr.rel (%p644) target = $region93
        $region92: #{siglip_mlp.1} parent=76 // pred_region
          %s648 = ssub.s32 128, 128
          %649 = vsyncadd %s640, %s648
          %s650 = smul.addr %s23, 128
          %s651 = scalar_lea.hbm %s5, %s650
          %s653 = sshll.u32 %s643, 4
          %s654 = int_to_ptr.vmem [resolvable:$true] %s653
          %656 = dma.vmem_to_hbm [thread:$0]  %s654, 128, %s651, %s640
        $region93: #{siglip_mlp.1} parent=76 // pred_fallthru
          _
      $region77: #{siglip_mlp.1} parent=5 // pred_fallthru
        _
      %p657 = scmp.le.s32.totalorder 2, %s14
      // Predicated region
      $region94: #{siglip_mlp.1} parent=5 // pred_check
        %p658 = pneg %p657
      $region95: #{siglip_mlp.1} parent=5 // pred_check_branch
        %660 = sbr.rel (%p658) target = $region97
      $region96: #{siglip_mlp.1} parent=5 // pred_region
        %s661 = ssub.s32 %s14, 2
        // Predicated region
        $region98: #{siglip_mlp.1} parent=96 // pred_check
          %p662 = pneg %p180
        $region99: #{siglip_mlp.1} parent=96 // pred_check_branch
          %664 = sbr.rel (%p662) target = $region101
        $region100: #{siglip_mlp.1} parent=96 // pred_region
          %s665 = sand.u32 %s165, 1
          %s666 = scalar_lea.sflag [#allocation5], %s665
          %s667 = sand.u32 %s165, 1
          %s668 = smul.addr %s667, 8
          %s669 = scalar_lea.vmem [#allocation4], %s668
          %670 = dma.done %s666, 128
        $region101: #{siglip_mlp.1} parent=96 // pred_fallthru
          _
      $region97: #{siglip_mlp.1} parent=5 // pred_fallthru
        _
    $region6: #{siglip_mlp.1} parent=1 // loop_footer
      %s18 = sadd.s32 1, %s14
    $region7: #{siglip_mlp.1} parent=1 // loop_footer_branch
      %13 = sbr.rel target = $region3
    $region8: #{siglip_mlp.1} parent=1 // loop_exit
      _
    %671 = vsyncpa [#allocation5], 1
    %s672 = scalar_lea.sflag [#allocation5], 1
    %673 = vsyncpa %s672, 1

</llo_original>
